<compile_context>
chip_gen: v7x
topology: tpu7x:2x2x1
jax: 0.10.0
libtpu: 0.0.40
codegen_flags: <defaults>
</compile_context>

<pallas_src>
import functools

import jax
import jax.numpy as jnp
from jax.experimental import pallas as pl
from jax.experimental.pallas import tpu as pltpu


def _distill_kernel(s_ref, t_ref, lab_ref, o_ref, *,
                    w_kl, w_ce, inv_temp, batch, mask_rows):
    i = pl.program_id(0)

    s = s_ref[...].astype(jnp.float32)      # (TB, C) student logits
    t = t_ref[...].astype(jnp.float32)      # (TB, C) teacher logits
    lab = lab_ref[...]                      # (TB, 1) int32 labels

    TB, C = s.shape

    row_valid = None
    if mask_rows:
        # Partial last batch tile: Pallas leaves unspecified data in the
        # out-of-bounds rows, so neutralize the *inputs* before any exp/log
        # (zeroed logits keep every downstream term finite).
        row_ids = i * TB + jax.lax.broadcasted_iota(jnp.int32, (TB, 1), 0)
        row_valid = row_ids < batch                               # (TB, 1) bool
        s = jnp.where(row_valid, s, jnp.float32(0.0))
        t = jnp.where(row_valid, t, jnp.float32(0.0))

    # ---- Shared student row-max / shift (used by both CE and KL) ----
    s_max = jnp.max(s, axis=1, keepdims=True)
    s_shift = s - s_max                                           # (TB, C)
    log_z = jnp.log(jnp.sum(jnp.exp(s_shift), axis=1, keepdims=True))

    # ---- Cross-entropy term (per row), no one-hot materialization ----
    col_ids = jax.lax.broadcasted_iota(jnp.int32, (TB, C), 1)
    picked = jnp.sum(jnp.where(col_ids == lab, s_shift, jnp.float32(0.0)),
                     axis=1, keepdims=True)                       # s_shift[label]
    ce_row = log_z - picked                                       # (TB, 1)

    # ---- KL term at temperature T (per row), fused algebra ----
    #   kl = sum(p_t * (log p_t - log p_s))
    #      = sum(p_t * (tT_shift - sT_shift)) + (log_z_sT - log(tT_sum))
    if inv_temp == 1.0:
        # Temperature == 1: reuse the CE shift / normalizer (trace-time branch).
        sT_shift = s_shift
        log_z_sT = log_z
        tT = t
    else:
        inv_T = jnp.float32(inv_temp)
        sT_shift = s_shift * inv_T            # max(s)/T == max(s/T)
        log_z_sT = jnp.log(jnp.sum(jnp.exp(sT_shift), axis=1, keepdims=True))
        tT = t * inv_T

    tT_max = jnp.max(tT, axis=1, keepdims=True)
    tT_shift = tT - tT_max
    tT_exp = jnp.exp(tT_shift)
    tT_sum = jnp.sum(tT_exp, axis=1, keepdims=True)               # (TB, 1)
    # Exact division (NOT pl.reciprocal(approx=True)): the whole KL term scales
    # with this factor, approx reciprocal would blow the 1e-5 tolerance.
    p_t = tT_exp * (jnp.float32(1.0) / tT_sum)

    kl_row = (jnp.sum(p_t * (tT_shift - sT_shift), axis=1, keepdims=True)
              + (log_z_sT - jnp.log(tT_sum)))                     # (TB, 1)

    per_row = jnp.float32(w_kl) * kl_row + jnp.float32(w_ce) * ce_row
    if mask_rows:
        per_row = jnp.where(row_valid, per_row, jnp.float32(0.0))

    o_ref[0] = jnp.sum(per_row, axis=0, keepdims=True)            # (1, 1)


def _choose_tile_rows(batch, num_classes, tile_rows):
    """Pick TB: either == batch (full dim, always legal) or a multiple of 8."""
    if tile_rows is not None:
        tb = int(tile_rows)
    else:
        # ~2 MiB per (TB, C) f32 input tile: big enough to sit near the HBM
        # roofline on v5e/v6e, small enough that 2 inputs x 2 pipeline buffers
        # plus a handful of live (TB, C) f32 temporaries stays well inside the
        # 48 MiB vmem_limit we request (and v7x's 64 MiB physical VMEM).
        lanes = max(128, ((num_classes + 127) // 128) * 128)
        budget_per_input = 2 * 1024 * 1024
        tb = min(4096, budget_per_input // (lanes * 4))
    if tb >= batch:
        return batch
    tb = max(8, (tb // 8) * 8)
    return batch if tb >= batch else tb


def distill_loss(student_out, teacher_out, label, *, alpha, temperature,
                 tile_rows=None, vmem_limit_bytes=48 * 1024 * 1024):
    """Pallas implementation of DistillLoss.forward (K=None path)."""
    B, C = student_out.shape
    assert teacher_out.shape == (B, C)

    TB = _choose_tile_rows(B, C, tile_rows)
    num_tiles = (B + TB - 1) // TB
    mask_rows = (B % TB) != 0

    lab2d = label.astype(jnp.int32).reshape(B, 1)

    kernel = functools.partial(
        _distill_kernel,
        w_kl=float(alpha) * float(temperature) * float(temperature) / float(B),
        w_ce=(1.0 - float(alpha)) / float(B),
        inv_temp=1.0 / float(temperature),
        batch=int(B),
        mask_rows=bool(mask_rows),
    )

    itemsize = jnp.dtype(student_out.dtype).itemsize
    cost = pl.CostEstimate(
        flops=int(14 * B * C),
        transcendentals=int(3 * B * C),
        bytes_accessed=int(2 * B * C * itemsize + B * 4 + num_tiles * 4),
    )

    partials = pl.pallas_call(
        kernel,
        out_shape=jax.ShapeDtypeStruct((num_tiles, 1, 1), jnp.float32),
        grid=(num_tiles,),
        in_specs=[
            pl.BlockSpec((TB, C), lambda i: (i, 0)),   # student logits (no pad)
            pl.BlockSpec((TB, C), lambda i: (i, 0)),   # teacher logits (no pad)
            pl.BlockSpec((TB, 1), lambda i: (i, 0)),   # int32 labels
        ],
        out_specs=pl.BlockSpec((1, 1, 1), lambda i: (i, 0, 0)),
        compiler_params=pltpu.CompilerParams(
            dimension_semantics=("parallel",),
            vmem_limit_bytes=int(vmem_limit_bytes),
        ),
        cost_estimate=cost,
    )(student_out, teacher_out, lab2d)

    return jnp.sum(partials)


def _reference(student_out, teacher_out, label, *, alpha, temperature):
    # Pure-JAX reference for sanity checks (computed in f32).
    s = student_out.astype(jnp.float32)
    t = teacher_out.astype(jnp.float32)
    T = temperature
    log_p_s = jax.nn.log_softmax(s / T, axis=1)
    p_t = jax.nn.softmax(t / T, axis=1)
    log_p_t = jax.nn.log_softmax(t / T, axis=1)
    kl = jnp.sum(p_t * (log_p_t - log_p_s)) / s.shape[0]
    log_sm = jax.nn.log_softmax(s, axis=1)
    ce = -jnp.mean(jnp.take_along_axis(log_sm, label[:, None], axis=1))
    return kl * alpha * T * T + ce * (1.0 - alpha)


if __name__ == "__main__":
    key = jax.random.PRNGKey(0)

    # --- Case 1: module-default-ish small shapes (single full tile) ---
    ALPHA, TEMP = 0.5, 4.0
    B, C = 8, 32
    k1, k2, k3, key = jax.random.split(key, 4)
    student = jax.random.normal(k1, (B, C), dtype=jnp.float32)
    teacher = jax.random.normal(k2, (B, C), dtype=jnp.float32)
    label = jax.random.randint(k3, (B,), 0, C, dtype=jnp.int32)
    loss = jax.block_until_ready(
        distill_loss(student, teacher, label, alpha=ALPHA, temperature=TEMP))
    ref = _reference(student, teacher, label, alpha=ALPHA, temperature=TEMP)
    assert jnp.allclose(loss, ref, rtol=1e-5, atol=1e-5), (loss, ref)

    # --- Case 2: multi-tile grid, partial last tile, C not multiple of 128 ---
    ALPHA2, TEMP2 = 0.7, 2.0
    B2, C2 = 20, 200
    k1, k2, k3, key = jax.random.split(key, 4)
    student2 = jax.random.normal(k1, (B2, C2), dtype=jnp.float32)
    teacher2 = jax.random.normal(k2, (B2, C2), dtype=jnp.float32)
    label2 = jax.random.randint(k3, (B2,), 0, C2, dtype=jnp.int32)
    loss2 = jax.block_until_ready(
        distill_loss(student2, teacher2, label2, alpha=ALPHA2,
                     temperature=TEMP2, tile_rows=8))  # 3 tiles, last partial
    ref2 = _reference(student2, teacher2, label2, alpha=ALPHA2, temperature=TEMP2)
    assert jnp.allclose(loss2, ref2, rtol=1e-5, atol=1e-5), (loss2, ref2)

    # --- Case 3: temperature == 1 specialization, ragged C=1000, B not %8 ---
    ALPHA3, TEMP3 = 0.3, 1.0
    B3, C3 = 12, 1000
    k1, k2, k3, key = jax.random.split(key, 4)
    student3 = jax.random.normal(k1, (B3, C3), dtype=jnp.float32)
    teacher3 = jax.random.normal(k2, (B3, C3), dtype=jnp.float32)
    label3 = jax.random.randint(k3, (B3,), 0, C3, dtype=jnp.int32)
    loss3 = jax.block_until_ready(
        distill_loss(student3, teacher3, label3, alpha=ALPHA3, temperature=TEMP3))
    ref3 = _reference(student3, teacher3, label3, alpha=ALPHA3, temperature=TEMP3)
    assert jnp.allclose(loss3, ref3, rtol=1e-5, atol=1e-5), (loss3, ref3)

    # --- Case 4: bf16 logits passed through unconverted (half HBM traffic) ---
    ALPHA4, TEMP4 = 0.25, 3.0
    B4, C4 = 16, 96
    k1, k2, k3, key = jax.random.split(key, 4)
    student4 = jax.random.normal(k1, (B4, C4), dtype=jnp.bfloat16)
    teacher4 = jax.random.normal(k2, (B4, C4), dtype=jnp.bfloat16)
    label4 = jax.random.randint(k3, (B4,), 0, C4, dtype=jnp.int32)
    loss4 = jax.block_until_ready(
        distill_loss(student4, teacher4, label4, alpha=ALPHA4, temperature=TEMP4))
    ref4 = _reference(student4, teacher4, label4, alpha=ALPHA4, temperature=TEMP4)
    assert jnp.allclose(loss4, ref4, rtol=1e-5, atol=1e-4), (loss4, ref4)

    print("KERNEL_OK")
</pallas_src>

<mosaic_0001>
module attributes {stable_mosaic.version = 11 : i64} {
  func.func @_distill_kernel(%arg0: i32, %arg1: memref<8x32xf32, #tpu.memory_space<vmem>>, %arg2: memref<8x32xf32, #tpu.memory_space<vmem>>, %arg3: memref<8x1xi32, #tpu.memory_space<vmem>>, %arg4: memref<1x1x1xf32, #tpu.memory_space<vmem>>) attributes {dimension_semantics = [#tpu.dimension_semantics<parallel>], iteration_bounds = array<i64: 1>, scalar_prefetch = 0 : i64, scratch_operands = 0 : i64, tpu.core_type = #tpu.core_type<tc>, window_params = [{transform_indices = @transform_0, window_bounds = array<i64: 8, 32>}, {transform_indices = @transform_1, window_bounds = array<i64: 8, 32>}, {transform_indices = @transform_2, window_bounds = array<i64: 8, 1>}, {transform_indices = @transform_3, window_bounds = array<i64: 1, 1, 1>}]} {
    %c0 = arith.constant 0 : index
    %c0_0 = arith.constant 0 : index
    %0 = vector.load %arg1[%c0, %c0_0] : memref<8x32xf32, #tpu.memory_space<vmem>>, vector<8x32xf32>
    %c0_1 = arith.constant 0 : index
    %c0_2 = arith.constant 0 : index
    %1 = vector.load %arg2[%c0_1, %c0_2] : memref<8x32xf32, #tpu.memory_space<vmem>>, vector<8x32xf32>
    %c0_3 = arith.constant 0 : index
    %c0_4 = arith.constant 0 : index
    %2 = vector.load %arg3[%c0_3, %c0_4] : memref<8x1xi32, #tpu.memory_space<vmem>>, vector<8x1xi32>
    %cst = arith.constant dense<0xFF800000> : vector<8xf32>
    %3 = vector.multi_reduction <maximumf>, %0, %cst [1] : vector<8x32xf32> to vector<8xf32>
    %4 = vector.shape_cast %3 : vector<8xf32> to vector<8x1xf32>
    %5 = vector.broadcast %4 : vector<8x1xf32> to vector<8x32xf32>
    %6 = arith.subf %0, %5 : vector<8x32xf32>
    %7 = math.exp %6 : vector<8x32xf32>
    %cst_5 = arith.constant dense<0.000000e+00> : vector<8xf32>
    %8 = vector.multi_reduction <add>, %7, %cst_5 [1] : vector<8x32xf32> to vector<8xf32>
    %9 = vector.shape_cast %8 : vector<8xf32> to vector<8x1xf32>
    %10 = math.log %9 : vector<8x1xf32>
    %11 = tpu.iota {dimensions = array<i32: 1>} : vector<8x32xi32>
    %12 = vector.broadcast %2 : vector<8x1xi32> to vector<8x32xi32>
    %13 = arith.cmpi eq, %11, %12 : vector<8x32xi32>
    %cst_6 = arith.constant 0.000000e+00 : f32
    %14 = vector.broadcast %cst_6 : f32 to vector<8x32xf32>
    %15 = arith.select %13, %6, %14 : vector<8x32xi1>, vector<8x32xf32>
    %cst_7 = arith.constant dense<0.000000e+00> : vector<8xf32>
    %16 = vector.multi_reduction <add>, %15, %cst_7 [1] : vector<8x32xf32> to vector<8xf32>
    %17 = vector.shape_cast %16 : vector<8xf32> to vector<8x1xf32>
    %18 = arith.subf %10, %17 : vector<8x1xf32>
    %cst_8 = arith.constant 2.500000e-01 : f32
    %19 = vector.broadcast %cst_8 : f32 to vector<8x32xf32>
    %20 = arith.mulf %6, %19 : vector<8x32xf32>
    %21 = math.exp %20 : vector<8x32xf32>
    %cst_9 = arith.constant dense<0.000000e+00> : vector<8xf32>
    %22 = vector.multi_reduction <add>, %21, %cst_9 [1] : vector<8x32xf32> to vector<8xf32>
    %23 = vector.shape_cast %22 : vector<8xf32> to vector<8x1xf32>
    %24 = math.log %23 : vector<8x1xf32>
    %cst_10 = arith.constant 2.500000e-01 : f32
    %25 = vector.broadcast %cst_10 : f32 to vector<8x32xf32>
    %26 = arith.mulf %1, %25 : vector<8x32xf32>
    %cst_11 = arith.constant dense<0xFF800000> : vector<8xf32>
    %27 = vector.multi_reduction <maximumf>, %26, %cst_11 [1] : vector<8x32xf32> to vector<8xf32>
    %28 = vector.shape_cast %27 : vector<8xf32> to vector<8x1xf32>
    %29 = vector.broadcast %28 : vector<8x1xf32> to vector<8x32xf32>
    %30 = arith.subf %26, %29 : vector<8x32xf32>
    %31 = math.exp %30 : vector<8x32xf32>
    %cst_12 = arith.constant dense<0.000000e+00> : vector<8xf32>
    %32 = vector.multi_reduction <add>, %31, %cst_12 [1] : vector<8x32xf32> to vector<8xf32>
    %33 = vector.shape_cast %32 : vector<8xf32> to vector<8x1xf32>
    %cst_13 = arith.constant 1.000000e+00 : f32
    %34 = vector.broadcast %cst_13 : f32 to vector<8x1xf32>
    %35 = arith.divf %34, %33 : vector<8x1xf32>
    %36 = vector.broadcast %35 : vector<8x1xf32> to vector<8x32xf32>
    %37 = arith.mulf %31, %36 : vector<8x32xf32>
    %38 = arith.subf %30, %20 : vector<8x32xf32>
    %39 = arith.mulf %37, %38 : vector<8x32xf32>
    %cst_14 = arith.constant dense<0.000000e+00> : vector<8xf32>
    %40 = vector.multi_reduction <add>, %39, %cst_14 [1] : vector<8x32xf32> to vector<8xf32>
    %41 = vector.shape_cast %40 : vector<8xf32> to vector<8x1xf32>
    %42 = math.log %33 : vector<8x1xf32>
    %43 = arith.subf %24, %42 : vector<8x1xf32>
    %44 = arith.addf %41, %43 : vector<8x1xf32>
    %cst_15 = arith.constant 1.000000e+00 : f32
    %45 = vector.broadcast %cst_15 : f32 to vector<8x1xf32>
    %46 = arith.mulf %45, %44 : vector<8x1xf32>
    %cst_16 = arith.constant 6.250000e-02 : f32
    %47 = vector.broadcast %cst_16 : f32 to vector<8x1xf32>
    %48 = arith.mulf %47, %18 : vector<8x1xf32>
    %49 = arith.addf %46, %48 : vector<8x1xf32>
    %cst_17 = arith.constant dense<0.000000e+00> : vector<1xf32>
    %50 = vector.multi_reduction <add>, %49, %cst_17 [0] : vector<8x1xf32> to vector<1xf32>
    %51 = vector.shape_cast %50 : vector<1xf32> to vector<1x1xf32>
    %c0_18 = arith.constant 0 : index
    %c0_19 = arith.constant 0 : index
    %c0_20 = arith.constant 0 : index
    %52 = vector.load %arg4[%c0_18, %c0_19, %c0_20] : memref<1x1x1xf32, #tpu.memory_space<vmem>>, vector<1x1x1xf32>
    %53 = vector.shape_cast %52 : vector<1x1x1xf32> to vector<1x1xf32>
    %54 = vector.shape_cast %51 : vector<1x1xf32> to vector<1x1x1xf32>
    tpu.vector_store %arg4[%c0_18, %c0_19, %c0_20], %54 {strides = array<i32>} : memref<1x1x1xf32, #tpu.memory_space<vmem>>, vector<1x1x1xf32>,
    return
  }
  func.func @transform_0(%arg0: i32) -> (i32, i32) {
    %c0_i32 = arith.constant 0 : i32
    %c0_i32_0 = arith.constant 0 : i32
    return %arg0, %c0_i32 : i32, i32
  }
  func.func @transform_1(%arg0: i32) -> (i32, i32) {
    %c0_i32 = arith.constant 0 : i32
    %c0_i32_0 = arith.constant 0 : i32
    return %arg0, %c0_i32 : i32, i32
  }
  func.func @transform_2(%arg0: i32) -> (i32, i32) {
    %c0_i32 = arith.constant 0 : i32
    %c0_i32_0 = arith.constant 0 : i32
    return %arg0, %c0_i32 : i32, i32
  }
  func.func @transform_3(%arg0: i32) -> (i32, i32, i32) {
    %c0_i32 = arith.constant 0 : i32
    %c0_i32_0 = arith.constant 0 : i32
    %c0_i32_1 = arith.constant 0 : i32
    return %arg0, %c0_i32, %c0_i32_0 : i32, i32, i32
  }
}

</mosaic_0001>

<llo_original>
// kernel: tpu_custom_call.1
$region0: #{tpu_custom_call.1}
  #allocation0 [shape = 'u32[]', space=smem, size = 0x4, offset = 0x4, fixed_abs, tag = 'smem constant byte address 0x4 - core index']
  #allocation1 [shape = 'u32[144,128]{1,0:T(1,128)}', space=vmem, size = 0x12000, scoped, tag = 'internal scratch']
  %s0 = inlined_call_operand.vmem [shape: f32[8,32], index: 0, kind: input, shape index: {}]
  %s1 = inlined_call_operand.hbm [shape: f32[8,32], index: 1, kind: input, shape index: {}]
  %s2 = inlined_call_operand.vmem [shape: s32[8,1], index: 2, kind: input, shape index: {}]
  %s3 = inlined_call_operand.hbm [shape: f32[1,1,1], index: 3, kind: output, shape index: {}]
  %s4 = sld [smem:[#allocation0]]
  $region26: #{tpu_custom_call.1} parent=0
    _
  %s6 = ssub.s32 1, %s4
  %s7 = scalar_select 0, %s6, %s4
  $region1: #{tpu_custom_call.1} parent=0
    #allocation2 [shape = 'u8[4096]{0}', space=vmem, size = 0x1000, scoped, tag = 'input window, operand 1, single buffered']
    #allocation3 [shape = 's32[1]{0}', space=sflag, size = 0x4, scoped, tag = 'scoped memory for tpu_custom_call.1']
    #allocation4 [shape = 's32[1]{0}', space=sflag, size = 0x4, scoped, tag = 'scoped memory for tpu_custom_call.1']
    #allocation5 [shape = 'u8[512]{0}', space=vmem, size = 0x400, scoped, tag = 'output window, operand 0, single buffered']
    %8 = vsyncpa [#allocation3], 0
    %9 = vsyncpa [#allocation4], 0
    // Predicated region
    $region2: #{tpu_custom_call.1} parent=1 // pred_check
      _
    $region3: #{tpu_custom_call.1} parent=1 // pred_check_branch
      %11 = sbr.rel (0) target = $region5
    $region4: #{tpu_custom_call.1} parent=1 // pred_region
      _
    $region5: #{tpu_custom_call.1} parent=1 // pred_fallthru
      _
    // Predicated region
    $region6: #{tpu_custom_call.1} parent=1 // pred_check
      _
    $region7: #{tpu_custom_call.1} parent=1 // pred_check_branch
      %13 = sbr.rel (0) target = $region9
    $region8: #{tpu_custom_call.1} parent=1 // pred_region
      %s15 = ssub.s32 128, 128
      %16 = vsyncadd [#allocation3], %s15
      %s18 = sshll.u32 [#allocation2], 4
      %s19 = int_to_ptr.vmem [resolvable:$true] %s18
      %21 = dma.hbm_to_vmem [thread:$0]  %s1, 128, %s19, [#allocation3]
    $region9: #{tpu_custom_call.1} parent=1 // pred_fallthru
      _
    // Predicated region
    $region10: #{tpu_custom_call.1} parent=1 // pred_check
      _
    $region11: #{tpu_custom_call.1} parent=1 // pred_check_branch
      %23 = sbr.rel (0) target = $region13
    $region12: #{tpu_custom_call.1} parent=1 // pred_region
      _
    $region13: #{tpu_custom_call.1} parent=1 // pred_fallthru
      _
    // Predicated region
    $region14: #{tpu_custom_call.1} parent=1 // pred_check
      _
    $region15: #{tpu_custom_call.1} parent=1 // pred_check_branch
      %25 = sbr.rel (0) target = $region17
    $region16: #{tpu_custom_call.1} parent=1 // pred_region
      %26 = dma.done [#allocation3], 128
    $region17: #{tpu_custom_call.1} parent=1 // pred_fallthru
      _
    %v27 = vld [vmem:[%s0] sm:$0xff]
    %v28 = vld [vmem:[#allocation2] sm:$0xff]
    %v29 = vld [vmem:[%s2] sm:$0xff]
    %vm30 = vcmask 261120
    %v31 = vsel %vm30, %v27, -inf
    %32 = vmax.xlane.f32.xlu0 %v31
    %v33 = vpop.xlane.xlu0 %32
    %v34 = vsub.f32 %v27, %v33
    %v35 = vmul.f32 %v34, 1.442695
    %v36 = vpow.pop %v35
    %v37 = vsel %vm30, %v36, 0.0
    %38 = vadd.xlane.f32.xlu0 %v37
    %v39 = vpop.xlane.xlu0 %38
    %v40 = vlog2.pop %v39
    %v41 = vmul.f32 %v40, 0.6931472
    %v42 = vlaneseq
    %v43 = vand.u32 %v42, 127
    %44 = vset.pattern.permute.xlu0 0
    %45 = vperm.xlu0 %44, %v29
    %v46 = vpop.permute.xlu0 %45
    %vm47 = vcmp.eq.s32.totalorder %v43, %v46
    %v48 = vsel %vm47, %v34, 0.0
    %v49 = vsel %vm30, %v48, 0.0
    %50 = vadd.xlane.f32.xlu0 %v49
    %v51 = vpop.xlane.xlu0 %50
    %v52 = vsub.f32 %v41, %v51
    %v53 = vmul.f32 %v34, 0.25
    %v54 = vmul.f32 %v53, 1.442695
    %v55 = vpow.pop %v54
    %v56 = vsel %vm30, %v55, 0.0
    %57 = vadd.xlane.f32.xlu0 %v56
    %v58 = vpop.xlane.xlu0 %57
    %v59 = vlog2.pop %v58
    %v60 = vmul.f32 %v59, 0.6931472
    %v61 = vmul.f32 %v28, 0.25
    %v62 = vsel %vm30, %v61, -inf
    %63 = vmax.xlane.f32.xlu0 %v62
    %v64 = vpop.xlane.xlu0 %63
    %v65 = vsub.f32 %v61, %v64
    %v66 = vmul.f32 %v65, 1.442695
    %v67 = vpow.pop %v66
    %v68 = vsel %vm30, %v67, 0.0
    %69 = vadd.xlane.f32.xlu0 %v68
    %v70 = vpop.xlane.xlu0 %69
    %v71 = vrcp.pop %v70
    %v72 = vmul.f32 1.0, %v71
    %v73 = vmul.f32 %v67, %v72
    %v74 = vsub.f32 %v65, %v53
    %v75 = vmul.f32 %v73, %v74
    %v76 = vsel %vm30, %v75, 0.0
    %77 = vadd.xlane.f32.xlu0 %v76
    %v78 = vpop.xlane.xlu0 %77
    %v79 = vlog2.pop %v70
    %v80 = vmul.f32 %v79, 0.6931472
    %v81 = vsub.f32 %v60, %v80
    %v82 = vadd.f32 %v78, %v81
    %v83 = vmul.f32 %v52, 0.0625
    %v84 = vadd.f32 %v82, %v83
    %v85 = vrot.slane %v84, 4
    %v86 = vadd.f32 %v84, %v85
    %v87 = vrot.slane %v86, 2
    %v88 = vadd.f32 %v86, %v87
    %v89 = vrot.slane %v88, 1
    %v90 = vadd.f32 %v88, %v89
    %vm91 = vcmask 0
    %92 = vst.msk [vmem:[#allocation5] sm:$0x1] %vm91, %v90
    // Predicated region
    $region18: #{tpu_custom_call.1} parent=1 // pred_check
      _
    $region19: #{tpu_custom_call.1} parent=1 // pred_check_branch
      %94 = sbr.rel (0) target = $region21
    $region20: #{tpu_custom_call.1} parent=1 // pred_region
      %s96 = ssub.s32 16, 16
      %97 = vsyncadd [#allocation4], %s96
      %s99 = sshll.u32 [#allocation5], 4
      %s100 = int_to_ptr.vmem [resolvable:$true] %s99
      %102 = dma.vmem_to_hbm [thread:$0]  %s100, 16, %s3, [#allocation4]
    $region21: #{tpu_custom_call.1} parent=1 // pred_fallthru
      _
    // Predicated region
    $region22: #{tpu_custom_call.1} parent=1 // pred_check
      _
    $region23: #{tpu_custom_call.1} parent=1 // pred_check_branch
      %104 = sbr.rel (0) target = $region25
    $region24: #{tpu_custom_call.1} parent=1 // pred_region
      %105 = dma.done [#allocation4], 16
    $region25: #{tpu_custom_call.1} parent=1 // pred_fallthru
      _
    %106 = vsyncpa [#allocation3], 1
    %107 = vsyncpa [#allocation4], 1

</llo_original>
